<compile_context>
chip_gen: v7x
topology: tpu7x:2x2x1
jax: 0.10.0
libtpu: 0.0.40
codegen_flags: <defaults>
</compile_context>

<pallas_src>
import functools

import jax
import jax.numpy as jnp
from jax.experimental import pallas as pl
from jax.experimental.pallas import tpu as pltpu

INPUT_SIZE = 4
NUM_CLASSES = 3
LANE = 128      # pad the class dim to a full lane width -> lane-dense output stores
MAX_TB = 512    # batch tile; >=512 measured near HBM roofline when B is large


def _round_up(x, m):
    return (x + m - 1) // m * m


def linear_kernel(x_ref, wt_ref, b_ref, o_ref):
    # out = x @ W_pad + b_pad  (one MXU matmul + one VPU broadcast add).
    acc = jnp.dot(x_ref[...], wt_ref[...], preferred_element_type=jnp.float32)
    o_ref[...] = (acc + b_ref[...]).astype(o_ref.dtype)


def prepare_params(weight, bias):
    """Done ONCE outside the hot path: transpose the PyTorch-style (C, D) weight
    to (D, C) and zero-pad the class dim to a full 128-lane slab."""
    C, D = weight.shape
    wt_pad = jnp.zeros((D, LANE), dtype=weight.dtype).at[:, :C].set(weight.T)
    bias_pad = jnp.zeros((1, LANE), dtype=bias.dtype).at[0, :C].set(bias)
    return wt_pad, bias_pad


@functools.partial(jax.jit, static_argnames=("num_classes",))
def logistic_regression_forward(x, wt_pad, bias_pad, num_classes=NUM_CLASSES):
    """x: (B, D) f32; wt_pad: (D, 128); bias_pad: (1, 128). Returns (B, num_classes)."""
    B, D = x.shape

    # Batch tile: large enough to amortize per-step overhead, never larger than
    # the (sublane-rounded) batch. Pad the batch so it divides evenly.
    tb = min(MAX_TB, _round_up(B, 8))
    b_rows = _round_up(B, tb)
    if b_rows != B:
        x = jnp.pad(x, ((0, b_rows - B), (0, 0)))
    grid = (b_rows // tb,)

    itemsize = jnp.dtype(x.dtype).itemsize
    out_padded = pl.pallas_call(
        linear_kernel,
        out_shape=jax.ShapeDtypeStruct((b_rows, LANE), x.dtype),
        grid=grid,
        in_specs=[
            pl.BlockSpec((tb, D), lambda i: (i, 0)),       # stream batch tiles
            pl.BlockSpec((D, LANE), lambda i: (0, 0)),     # weight: VMEM-resident
            pl.BlockSpec((1, LANE), lambda i: (0, 0)),     # bias:   VMEM-resident
        ],
        out_specs=pl.BlockSpec((tb, LANE), lambda i: (i, 0)),  # lane-dense stores
        compiler_params=pltpu.CompilerParams(
            # Batch tiles are independent -> shard the grid across both TCs on v7x.
            dimension_semantics=("parallel",),
        ),
        cost_estimate=pl.CostEstimate(
            flops=2 * b_rows * D * LANE,
            transcendentals=0,
            bytes_accessed=(b_rows * D + D * LANE + LANE + b_rows * LANE) * itemsize,
        ),
    )(x, wt_pad, bias_pad)

    # Strip batch + class padding back to the logical output.
    return out_padded[:B, :num_classes]


if __name__ == "__main__":
    key = jax.random.PRNGKey(0)
    kx, kw, kb = jax.random.split(key, 3)

    batch = 8
    # Deterministic synthetic parameters (same shapes as nn.Linear(4, 3)).
    x = jax.random.normal(kx, (batch, INPUT_SIZE), dtype=jnp.float32)
    weight = jax.random.normal(kw, (NUM_CLASSES, INPUT_SIZE), dtype=jnp.float32) * 0.1
    bias = jax.random.normal(kb, (NUM_CLASSES,), dtype=jnp.float32) * 0.1

    # Parameter prep is done once (outside the per-call hot path).
    wt_pad, bias_pad = prepare_params(weight, bias)

    out = logistic_regression_forward(x, wt_pad, bias_pad)
    out = jax.block_until_ready(out)

    # Reference check in plain JAX (same math as torch nn.Linear forward).
    ref = x @ weight.T + bias
    assert out.shape == (batch, NUM_CLASSES)
    assert jnp.allclose(out, ref, atol=1e-5), "mismatch vs reference"

    print("KERNEL_OK")
</pallas_src>

<mosaic_0001>
module attributes {stable_mosaic.version = 11 : i64} {
  func.func @linear_kernel(%arg0: i32, %arg1: memref<8x4xf32, #tpu.memory_space<vmem>>, %arg2: memref<4x128xf32, #tpu.memory_space<vmem>>, %arg3: memref<1x128xf32, #tpu.memory_space<vmem>>, %arg4: memref<8x128xf32, #tpu.memory_space<vmem>>) attributes {dimension_semantics = [#tpu.dimension_semantics<parallel>], iteration_bounds = array<i64: 1>, scalar_prefetch = 0 : i64, scratch_operands = 0 : i64, tpu.core_type = #tpu.core_type<tc>, window_params = [{transform_indices = @transform_0, window_bounds = array<i64: 8, 4>}, {pipeline_mode = #tpu.pipeline_mode<synchronous>, transform_indices = @transform_1, window_bounds = array<i64: 4, 128>}, {pipeline_mode = #tpu.pipeline_mode<synchronous>, transform_indices = @transform_2, window_bounds = array<i64: 1, 128>}, {transform_indices = @transform_3, window_bounds = array<i64: 8, 128>}]} {
    %c0 = arith.constant 0 : index
    %c0_0 = arith.constant 0 : index
    %0 = vector.load %arg1[%c0, %c0_0] : memref<8x4xf32, #tpu.memory_space<vmem>>, vector<8x4xf32>
    %c0_1 = arith.constant 0 : index
    %c0_2 = arith.constant 0 : index
    %1 = vector.load %arg2[%c0_1, %c0_2] : memref<4x128xf32, #tpu.memory_space<vmem>>, vector<4x128xf32>
    %cst = arith.constant dense<0.000000e+00> : vector<8x128xf32>
    %2 = tpu.matmul %0, %1, %cst {dimension_numbers = #tpu.dot_dimension_numbers<[1], [0], [0], [1], [0, 0, 1, 1], [], []>} : vector<8x4xf32>, vector<4x128xf32>, vector<8x128xf32> -> vector<8x128xf32>
    %c0_3 = arith.constant 0 : index
    %c0_4 = arith.constant 0 : index
    %3 = vector.load %arg3[%c0_3, %c0_4] : memref<1x128xf32, #tpu.memory_space<vmem>>, vector<1x128xf32>
    %4 = vector.broadcast %3 : vector<1x128xf32> to vector<8x128xf32>
    %5 = arith.addf %2, %4 : vector<8x128xf32>
    %c0_5 = arith.constant 0 : index
    %c0_6 = arith.constant 0 : index
    %6 = vector.load %arg4[%c0_5, %c0_6] : memref<8x128xf32, #tpu.memory_space<vmem>>, vector<8x128xf32>
    tpu.vector_store %arg4[%c0_5, %c0_6], %5 {strides = array<i32>} : memref<8x128xf32, #tpu.memory_space<vmem>>, vector<8x128xf32>,
    return
  }
  func.func @transform_0(%arg0: i32) -> (i32, i32) {
    %c0_i32 = arith.constant 0 : i32
    %c0_i32_0 = arith.constant 0 : i32
    return %arg0, %c0_i32 : i32, i32
  }
  func.func @transform_1(%arg0: i32) -> (i32, i32) {
    %c0_i32 = arith.constant 0 : i32
    %c0_i32_0 = arith.constant 0 : i32
    %c0_i32_1 = arith.constant 0 : i32
    return %c0_i32, %c0_i32_0 : i32, i32
  }
  func.func @transform_2(%arg0: i32) -> (i32, i32) {
    %c0_i32 = arith.constant 0 : i32
    %c0_i32_0 = arith.constant 0 : i32
    %c0_i32_1 = arith.constant 0 : i32
    return %c0_i32, %c0_i32_0 : i32, i32
  }
  func.func @transform_3(%arg0: i32) -> (i32, i32) {
    %c0_i32 = arith.constant 0 : i32
    %c0_i32_0 = arith.constant 0 : i32
    return %arg0, %c0_i32 : i32, i32
  }
}

</mosaic_0001>

<llo_original>
// kernel: logistic_regression_forward.1
$region0: #{logistic_regression_forward.1}
  #allocation0 [shape = 'u32[]', space=smem, size = 0x4, offset = 0x4, fixed_abs, tag = 'smem constant byte address 0x4 - core index']
  #allocation1 [shape = 'u32[144,128]{1,0:T(1,128)}', space=vmem, size = 0x12000, scoped, tag = 'internal scratch']
  %s0 = inlined_call_operand.vmem [shape: f32[8,4], index: 0, kind: input, shape index: {}]
  %s1 = inlined_call_operand.vmem [shape: f32[4,128], index: 1, kind: input, shape index: {}]
  %s2 = inlined_call_operand.vmem [shape: f32[1,128], index: 2, kind: input, shape index: {}]
  %s3 = inlined_call_operand.vmem [shape: f32[8,128], index: 3, kind: output, shape index: {}]
  %s4 = sld [smem:[#allocation0]]
  $region22: #{logistic_regression_forward.1} parent=0
    _
  %s6 = ssub.s32 1, %s4
  %s7 = scalar_select 0, %s6, %s4
  // Predicated region
  $region2: #{logistic_regression_forward.1} parent=0 // pred_check
    _
  $region3: #{logistic_regression_forward.1} parent=0 // pred_check_branch
    %9 = sbr.rel (0) target = $region5
  $region4: #{logistic_regression_forward.1} parent=0 // pred_region
    _
  $region5: #{logistic_regression_forward.1} parent=0 // pred_fallthru
    _
  // Predicated region
  $region6: #{logistic_regression_forward.1} parent=0 // pred_check
    _
  $region7: #{logistic_regression_forward.1} parent=0 // pred_check_branch
    %11 = sbr.rel (0) target = $region9
  $region8: #{logistic_regression_forward.1} parent=0 // pred_region
    _
  $region9: #{logistic_regression_forward.1} parent=0 // pred_fallthru
    _
  // Predicated region
  $region10: #{logistic_regression_forward.1} parent=0 // pred_check
    _
  $region11: #{logistic_regression_forward.1} parent=0 // pred_check_branch
    %13 = sbr.rel (0) target = $region13
  $region12: #{logistic_regression_forward.1} parent=0 // pred_region
    _
  $region13: #{logistic_regression_forward.1} parent=0 // pred_fallthru
    _
  %v14 = vld [vmem:[%s0] sm:$0xff]
  %v15 = vld [vmem:[%s1] sm:$0xf]
  %v16 = vld [vmem:[%s2] sm:$0x1]
  %v18 = vlaneseq
  %v19 = vshrl.u32 %v18, 7
  %v20 = vsub.s32 0, %v19
  %v21 = vrot.slane %v16, %v20
  %vm23 = vcmask 31744
  %v25 = vsel %vm23, %v14, 0
  %vm27 = vcmask 1043456
  %v29 = vsel %vm27, %v15, 0
  %31 = vmatprep.subr.mxu0 0.0
  %32 = vmatpush1.msra.mxu0 %v29
  %33 = vmatprep.subr.mxu0 0.0
  %34 = vmatpush1.msra.mxu0 0.0
  %35 = vmatprep.subr.mxu0 0.0
  %36 = vmatpush1.msra.mxu0 0.0
  %37 = vmatprep.subr.mxu0 0.0
  %38 = vmatpush1.msra.mxu0 0.0
  %39 = vmatprep.subr.mxu0 0.0
  %40 = vmatpush1.msra.mxu0 0.0
  %41 = vmatprep.subr.mxu0 0.0
  %42 = vmatpush1.msra.mxu0 0.0
  %43 = vmatprep.subr.mxu0 0.0
  %44 = vmatpush1.msra.mxu0 0.0
  %45 = vmatprep.subr.mxu0 0.0
  %46 = vmatpush1.msra.mxu0 0.0
  %47 = vmatprep.subr.mxu0 0.0
  %48 = vmatpush1.msra.mxu0 0.0
  %49 = vmatprep.subr.mxu0 0.0
  %50 = vmatpush1.msra.mxu0 0.0
  %51 = vmatprep.subr.mxu0 0.0
  %52 = vmatpush1.msra.mxu0 0.0
  %53 = vmatprep.subr.mxu0 0.0
  %54 = vmatpush1.msra.mxu0 0.0
  %55 = vmatprep.subr.mxu0 0.0
  %56 = vmatpush1.msra.mxu0 0.0
  %57 = vmatprep.subr.mxu0 0.0
  %58 = vmatpush1.msra.mxu0 0.0
  %59 = vmatprep.subr.mxu0 0.0
  %60 = vmatpush1.msra.mxu0 0.0
  %61 = vmatprep.subr.mxu0 0.0
  %62 = vmatpush1.msra.mxu0 0.0
  %63 = vmatprep.subr.mxu0 0.0
  %64 = vmatpush1.msra.mxu0 0.0
  %65 = vmatprep.subr.mxu0 0.0
  %66 = vmatpush1.msra.mxu0 0.0
  %67 = vmatprep.subr.mxu0 0.0
  %68 = vmatpush1.msra.mxu0 0.0
  %69 = vmatprep.subr.mxu0 0.0
  %70 = vmatpush1.msra.mxu0 0.0
  %71 = vmatprep.subr.mxu0 0.0
  %72 = vmatpush1.msra.mxu0 0.0
  %73 = vmatprep.subr.mxu0 0.0
  %74 = vmatpush1.msra.mxu0 0.0
  %75 = vmatprep.subr.mxu0 0.0
  %76 = vmatpush1.msra.mxu0 0.0
  %77 = vmatprep.subr.mxu0 0.0
  %78 = vmatpush1.msra.mxu0 0.0
  %79 = vmatprep.subr.mxu0 0.0
  %80 = vmatpush1.msra.mxu0 0.0
  %81 = vmatprep.subr.mxu0 0.0
  %82 = vmatpush1.msra.mxu0 0.0
  %83 = vmatprep.subr.mxu0 0.0
  %84 = vmatpush1.msra.mxu0 0.0
  %85 = vmatprep.subr.mxu0 0.0
  %86 = vmatpush1.msra.mxu0 0.0
  %87 = vmatprep.subr.mxu0 0.0
  %88 = vmatpush1.msra.mxu0 0.0
  %89 = vmatprep.subr.mxu0 0.0
  %90 = vmatpush1.msra.mxu0 0.0
  %91 = vmatprep.subr.mxu0 0.0
  %92 = vmatpush1.msra.mxu0 0.0
  %93 = vmatprep.subr.mxu0 0.0
  %94 = vmatpush1.msra.mxu0 0.0
  %95 = vmatprep.mubr.f32.mxu0 0.0
  %96 = vmatmul.mubr.f32.gmra.mrb[0].mxu0 %v25
  %v97 = vpop.f32.mrb[0].mxu0
  %v98 = vadd.f32 %v21, %v97
  %v99 = vpop.f32.mrb[0].mxu0
  %100 = vdwg.mxu0
  %101 = vst [vmem:[%s3] sm:$0xff] %v98
  // Predicated region
  $region14: #{logistic_regression_forward.1} parent=0 // pred_check
    _
  $region15: #{logistic_regression_forward.1} parent=0 // pred_check_branch
    %103 = sbr.rel (0) target = $region17
  $region16: #{logistic_regression_forward.1} parent=0 // pred_region
    _
  $region17: #{logistic_regression_forward.1} parent=0 // pred_fallthru
    _
  // Predicated region
  $region18: #{logistic_regression_forward.1} parent=0 // pred_check
    _
  $region19: #{logistic_regression_forward.1} parent=0 // pred_check_branch
    %105 = sbr.rel (0) target = $region21
  $region20: #{logistic_regression_forward.1} parent=0 // pred_region
    _
  $region21: #{logistic_regression_forward.1} parent=0 // pred_fallthru
    _

</llo_original>
